<compile_context>
chip_gen: v7x
topology: tpu7x:2x2x1
jax: 0.10.0
libtpu: 0.0.40
codegen_flags: <defaults>
</compile_context>

<pallas_src>
import math
import functools

import jax
import jax.numpy as jnp
from jax import lax
from jax.experimental import pallas as pl
from jax.experimental.pallas import tpu as pltpu


def _gelu_exact(x):
    # nn.GELU() default is the exact erf-based GELU (computed in f32 here).
    return 0.5 * x * (1.0 + lax.erf(x * (1.0 / math.sqrt(2.0))))


def _round_up(n, m):
    return ((n + m - 1) // m) * m


def mlp_kernel(x_ref, w1_ref, b1_ref, w2_ref, b2_ref, o_ref, acc_ref):
    """Grid = (row tiles, hidden tiles). Hidden axis is a fused reduction."""
    k = pl.program_id(1)

    @pl.when(k == 0)
    def _init():
        # Seed the accumulator with the fc2 bias (applied exactly once).
        acc_ref[...] = jnp.broadcast_to(b2_ref[...], acc_ref.shape)

    # fc1 partial: [tm, in] @ [in, tn]  (bf16 operands, f32 accumulate)
    h = jnp.dot(x_ref[...], w1_ref[...], preferred_element_type=jnp.float32)
    h = h + b1_ref[...]                       # fc1 bias for this hidden slice
    h = _gelu_exact(h)                        # activation per hidden tile (f32)

    # fc2 partial: [tm, tn] @ [tn, out] accumulated in f32 scratch
    acc_ref[...] += jnp.dot(h.astype(w2_ref.dtype), w2_ref[...],
                            preferred_element_type=jnp.float32)

    @pl.when(k == pl.num_programs(1) - 1)
    def _finalize():
        # dropout(p=0.0) is identity -> just cast and store once per row tile.
        o_ref[...] = acc_ref[...].astype(o_ref.dtype)


def _pad2d(a, shape, dtype):
    a = a.astype(dtype)
    if a.shape == shape:
        return a
    return jnp.zeros(shape, dtype).at[: a.shape[0], : a.shape[1]].set(a)


def mlp_pallas(x, w1, b1, w2, b2, *, tm=256, tn=512,
               compute_dtype=jnp.bfloat16):
    """x: [..., in_features] -> [..., out_features].

    Weights are stored transposed w.r.t. PyTorch (W1: [in, hidden],
    W2: [hidden, out]) so the kernel computes x @ W directly.
    tm / tn are sweepable tile parameters (rows per step, hidden slice width).
    """
    orig_shape = x.shape
    in_features = orig_shape[-1]
    hidden_features = w1.shape[1]
    out_features = w2.shape[1]
    out_dtype = x.dtype

    x2d = x.reshape(-1, in_features)
    T = x2d.shape[0]

    # Lane-dense padded feature sizes (multiples of 128).
    in_p = _round_up(in_features, 128)
    out_p = _round_up(out_features, 128)

    # Row tile: as large as requested but no bigger than the (8-aligned) token
    # count; pad tokens up to a multiple of tm (zero rows are sliced off).
    tm = min(tm, _round_up(T, 8))
    t_p = _round_up(T, tm)

    # Hidden tile: multiple of 128; pad hidden dim to a multiple of tn.
    tn = min(tn, _round_up(hidden_features, 128))
    hid_p = _round_up(hidden_features, tn)

    x_p = _pad2d(x2d, (t_p, in_p), compute_dtype)
    w1_p = _pad2d(w1, (in_p, hid_p), compute_dtype)
    w2_p = _pad2d(w2, (hid_p, out_p), compute_dtype)
    b1_p = _pad2d(b1.reshape(1, -1), (1, hid_p), jnp.float32)
    b2_p = _pad2d(b2.reshape(1, -1), (1, out_p), jnp.float32)

    grid = (t_p // tm, hid_p // tn)

    cd_bytes = jnp.dtype(compute_dtype).itemsize
    out_bytes = jnp.dtype(out_dtype).itemsize
    cost = pl.CostEstimate(
        flops=2 * t_p * (in_p * hid_p + hid_p * out_p),
        transcendentals=t_p * hid_p,
        bytes_accessed=(t_p * in_p * cd_bytes
                        + grid[0] * (in_p * hid_p + hid_p * out_p) * cd_bytes
                        + t_p * out_p * out_bytes
                        + (hid_p + out_p) * 4),
    )

    out = pl.pallas_call(
        mlp_kernel,
        out_shape=jax.ShapeDtypeStruct((t_p, out_p), out_dtype),
        grid_spec=pltpu.PrefetchScalarGridSpec(
            num_scalar_prefetch=0,
            grid=grid,
            in_specs=[
                pl.BlockSpec((tm, in_p), lambda i, k: (i, 0)),    # x rows (resident across k)
                pl.BlockSpec((in_p, tn), lambda i, k: (0, k)),    # W1 hidden slice
                pl.BlockSpec((1, tn), lambda i, k: (0, k)),       # b1 hidden slice
                pl.BlockSpec((tn, out_p), lambda i, k: (k, 0)),   # W2 hidden slice
                pl.BlockSpec((1, out_p), lambda i, k: (0, 0)),    # b2 (resident)
            ],
            out_specs=pl.BlockSpec((tm, out_p), lambda i, k: (i, 0)),
            scratch_shapes=[pltpu.VMEM((tm, out_p), jnp.float32)],
        ),
        compiler_params=pltpu.CompilerParams(
            dimension_semantics=("parallel", "arbitrary"),
            vmem_limit_bytes=48 * 1024 * 1024,
        ),
        cost_estimate=cost,
    )(x_p, w1_p, b1_p, w2_p, b2_p)

    out = out[:T, :out_features]
    return out.reshape(*orig_shape[:-1], out_features)


def mlp_reference_f32(x, w1, b1, w2, b2):
    h = jnp.dot(x, w1) + b1
    h = _gelu_exact(h)
    return jnp.dot(h, w2) + b2


if __name__ == "__main__":
    # Small shapes consistent with the module:
    # batch=2, seq=8 tokens, in_features=32, hidden_features=64, out_features=32
    B, S = 2, 8
    in_features, hidden_features, out_features = 32, 64, 32

    key = jax.random.PRNGKey(0)
    kx, k1, k2, k3, k4 = jax.random.split(key, 5)

    x = jax.random.normal(kx, (B, S, in_features), dtype=jnp.float32)

    # PyTorch Linear init bounds; weights stored transposed (x @ W layout).
    bound1 = 1.0 / math.sqrt(in_features)
    w1 = jax.random.uniform(k1, (in_features, hidden_features), jnp.float32,
                            minval=-bound1, maxval=bound1)
    b1 = jax.random.uniform(k2, (hidden_features,), jnp.float32,
                            minval=-bound1, maxval=bound1)
    bound2 = 1.0 / math.sqrt(hidden_features)
    w2 = jax.random.uniform(k3, (hidden_features, out_features), jnp.float32,
                            minval=-bound2, maxval=bound2)
    b2 = jax.random.uniform(k4, (out_features,), jnp.float32,
                            minval=-bound2, maxval=bound2)

    run = jax.jit(functools.partial(mlp_pallas, tm=256, tn=512))
    y = run(x, w1, b1, w2, b2)
    y = jax.block_until_ready(y)

    y_ref = mlp_reference_f32(x, w1, b1, w2, b2)
    assert y.shape == (B, S, out_features)
    # bf16 matmul operands with f32 accumulation -> loose tolerance vs f32 ref.
    assert jnp.allclose(y, y_ref, atol=3e-2, rtol=3e-2), "mismatch vs reference"

    print("KERNEL_OK")
</pallas_src>

<mosaic_0001>
module attributes {stable_mosaic.version = 11 : i64} {
  func.func @mlp_kernel(%arg0: i32, %arg1: i32, %arg2: memref<16x128xbf16, #tpu.memory_space<vmem>>, %arg3: memref<128x128xbf16, #tpu.memory_space<vmem>>, %arg4: memref<1x128xf32, #tpu.memory_space<vmem>>, %arg5: memref<128x128xbf16, #tpu.memory_space<vmem>>, %arg6: memref<1x128xf32, #tpu.memory_space<vmem>>, %arg7: memref<16x128xf32, #tpu.memory_space<vmem>>, %arg8: memref<16x128xf32, #tpu.memory_space<vmem>>) attributes {dimension_semantics = [#tpu.dimension_semantics<parallel>, #tpu.dimension_semantics<arbitrary>], iteration_bounds = array<i64: 1, 1>, scalar_prefetch = 0 : i64, scratch_operands = 1 : i64, tpu.core_type = #tpu.core_type<tc>, window_params = [{transform_indices = @transform_0, window_bounds = array<i64: 16, 128>}, {transform_indices = @transform_1, window_bounds = array<i64: 128, 128>}, {transform_indices = @transform_2, window_bounds = array<i64: 1, 128>}, {transform_indices = @transform_3, window_bounds = array<i64: 128, 128>}, {pipeline_mode = #tpu.pipeline_mode<synchronous>, transform_indices = @transform_4, window_bounds = array<i64: 1, 128>}, {transform_indices = @transform_5, window_bounds = array<i64: 16, 128>}]} {
    %c0_i32 = arith.constant 0 : i32
    %0 = arith.cmpi eq, %arg1, %c0_i32 : i32
    %1 = arith.extui %0 : i1 to i32
    %c0_i32_0 = arith.constant 0 : i32
    %2 = arith.cmpi ne, %1, %c0_i32_0 : i32
    scf.if %2 {
      %c0_18 = arith.constant 0 : index
      %c0_19 = arith.constant 0 : index
      %26 = vector.load %arg6[%c0_18, %c0_19] : memref<1x128xf32, #tpu.memory_space<vmem>>, vector<1x128xf32>
      %27 = vector.shape_cast %26 : vector<1x128xf32> to vector<1x128xf32>
      %28 = vector.broadcast %27 : vector<1x128xf32> to vector<16x128xf32>
      %c0_20 = arith.constant 0 : index
      %c0_21 = arith.constant 0 : index
      %29 = vector.load %arg8[%c0_20, %c0_21] : memref<16x128xf32, #tpu.memory_space<vmem>>, vector<16x128xf32>
      tpu.vector_store %arg8[%c0_20, %c0_21], %28 {strides = array<i32>} : memref<16x128xf32, #tpu.memory_space<vmem>>, vector<16x128xf32>,
    } else {
    }
    %c0 = arith.constant 0 : index
    %c0_1 = arith.constant 0 : index
    %3 = vector.load %arg2[%c0, %c0_1] : memref<16x128xbf16, #tpu.memory_space<vmem>>, vector<16x128xbf16>
    %c0_2 = arith.constant 0 : index
    %c0_3 = arith.constant 0 : index
    %4 = vector.load %arg3[%c0_2, %c0_3] : memref<128x128xbf16, #tpu.memory_space<vmem>>, vector<128x128xbf16>
    %cst = arith.constant dense<0.000000e+00> : vector<16x128xf32>
    %5 = tpu.matmul %3, %4, %cst {dimension_numbers = #tpu.dot_dimension_numbers<[1], [0], [0], [1], [0, 0, 1, 1], [], []>} : vector<16x128xbf16>, vector<128x128xbf16>, vector<16x128xf32> -> vector<16x128xf32>
    %c0_4 = arith.constant 0 : index
    %c0_5 = arith.constant 0 : index
    %6 = vector.load %arg4[%c0_4, %c0_5] : memref<1x128xf32, #tpu.memory_space<vmem>>, vector<1x128xf32>
    %7 = vector.broadcast %6 : vector<1x128xf32> to vector<16x128xf32>
    %8 = arith.addf %5, %7 : vector<16x128xf32>
    %cst_6 = arith.constant 5.000000e-01 : f32
    %9 = vector.broadcast %cst_6 : f32 to vector<16x128xf32>
    %10 = arith.mulf %9, %8 : vector<16x128xf32>
    %cst_7 = arith.constant 0.707106769 : f32
    %11 = vector.broadcast %cst_7 : f32 to vector<16x128xf32>
    %12 = arith.mulf %8, %11 : vector<16x128xf32>
    %13 = math.erf %12 : vector<16x128xf32>
    %cst_8 = arith.constant 1.000000e+00 : f32
    %14 = vector.broadcast %cst_8 : f32 to vector<16x128xf32>
    %15 = arith.addf %14, %13 : vector<16x128xf32>
    %16 = arith.mulf %10, %15 : vector<16x128xf32>
    %c0_9 = arith.constant 0 : index
    %c0_10 = arith.constant 0 : index
    %17 = vector.load %arg8[%c0_9, %c0_10] : memref<16x128xf32, #tpu.memory_space<vmem>>, vector<16x128xf32>
    %18 = arith.truncf %16 : vector<16x128xf32> to vector<16x128xbf16>
    %c0_11 = arith.constant 0 : index
    %c0_12 = arith.constant 0 : index
    %19 = vector.load %arg5[%c0_11, %c0_12] : memref<128x128xbf16, #tpu.memory_space<vmem>>, vector<128x128xbf16>
    %cst_13 = arith.constant dense<0.000000e+00> : vector<16x128xf32>
    %20 = tpu.matmul %18, %19, %cst_13 {dimension_numbers = #tpu.dot_dimension_numbers<[1], [0], [0], [1], [0, 0, 1, 1], [], []>} : vector<16x128xbf16>, vector<128x128xbf16>, vector<16x128xf32> -> vector<16x128xf32>
    %21 = arith.addf %17, %20 : vector<16x128xf32>
    %c0_14 = arith.constant 0 : index
    %c0_15 = arith.constant 0 : index
    %22 = vector.load %arg8[%c0_14, %c0_15] : memref<16x128xf32, #tpu.memory_space<vmem>>, vector<16x128xf32>
    tpu.vector_store %arg8[%c0_14, %c0_15], %21 {strides = array<i32>} : memref<16x128xf32, #tpu.memory_space<vmem>>, vector<16x128xf32>,
    %c0_i32_16 = arith.constant 0 : i32
    %23 = arith.cmpi eq, %arg1, %c0_i32_16 : i32
    %24 = arith.extui %23 : i1 to i32
    %c0_i32_17 = arith.constant 0 : i32
    %25 = arith.cmpi ne, %24, %c0_i32_17 : i32
    scf.if %25 {
      %c0_18 = arith.constant 0 : index
      %c0_19 = arith.constant 0 : index
      %26 = vector.load %arg8[%c0_18, %c0_19] : memref<16x128xf32, #tpu.memory_space<vmem>>, vector<16x128xf32>
      %c0_20 = arith.constant 0 : index
      %c0_21 = arith.constant 0 : index
      %27 = vector.load %arg7[%c0_20, %c0_21] : memref<16x128xf32, #tpu.memory_space<vmem>>, vector<16x128xf32>
      tpu.vector_store %arg7[%c0_20, %c0_21], %26 {strides = array<i32>} : memref<16x128xf32, #tpu.memory_space<vmem>>, vector<16x128xf32>,
    } else {
    }
    return
  }
  func.func @transform_0(%arg0: i32, %arg1: i32) -> (i32, i32) {
    %c0_i32 = arith.constant 0 : i32
    %c0_i32_0 = arith.constant 0 : i32
    return %arg0, %c0_i32 : i32, i32
  }
  func.func @transform_1(%arg0: i32, %arg1: i32) -> (i32, i32) {
    %c0_i32 = arith.constant 0 : i32
    %c0_i32_0 = arith.constant 0 : i32
    return %c0_i32, %arg1 : i32, i32
  }
  func.func @transform_2(%arg0: i32, %arg1: i32) -> (i32, i32) {
    %c0_i32 = arith.constant 0 : i32
    %c0_i32_0 = arith.constant 0 : i32
    return %c0_i32, %arg1 : i32, i32
  }
  func.func @transform_3(%arg0: i32, %arg1: i32) -> (i32, i32) {
    %c0_i32 = arith.constant 0 : i32
    %c0_i32_0 = arith.constant 0 : i32
    return %arg1, %c0_i32 : i32, i32
  }
  func.func @transform_4(%arg0: i32, %arg1: i32) -> (i32, i32) {
    %c0_i32 = arith.constant 0 : i32
    %c0_i32_0 = arith.constant 0 : i32
    %c0_i32_1 = arith.constant 0 : i32
    return %c0_i32, %c0_i32_0 : i32, i32
  }
  func.func @transform_5(%arg0: i32, %arg1: i32) -> (i32, i32) {
    %c0_i32 = arith.constant 0 : i32
    %c0_i32_0 = arith.constant 0 : i32
    return %arg0, %c0_i32 : i32, i32
  }
}

</mosaic_0001>

<llo_original>
// kernel: mlp_pallas.1
$region0: #{mlp_pallas.1}
  #allocation0 [shape = 'u32[]', space=smem, size = 0x4, offset = 0x4, fixed_abs, tag = 'smem constant byte address 0x4 - core index']
  #allocation1 [shape = 'u32[144,128]{1,0:T(1,128)}', space=vmem, size = 0x12000, scoped, tag = 'internal scratch']
  #allocation2 [shape = 'f32[16,128]{1,0:T(8,128)}', space=vmem, size = 0x2000, scoped, tag = 'scratch operand']
  %s0 = inlined_call_operand.vmem [shape: bf16[16,128], index: 0, kind: input, shape index: {}]
  %s1 = inlined_call_operand.vmem [shape: bf16[128,128], index: 1, kind: input, shape index: {}]
  %s2 = inlined_call_operand.vmem [shape: f32[1,128], index: 2, kind: input, shape index: {}]
  %s3 = inlined_call_operand.vmem [shape: bf16[128,128], index: 3, kind: input, shape index: {}]
  %s4 = inlined_call_operand.vmem [shape: f32[1,128], index: 4, kind: input, shape index: {}]
  %s5 = inlined_call_operand.vmem [shape: f32[16,128], index: 5, kind: output, shape index: {}]
  %s6 = sld [smem:[#allocation0]]
  $region38: #{mlp_pallas.1} parent=0
    _
  %s8 = ssub.s32 1, %s6
  %s9 = scalar_select 0, %s8, %s6
  // Predicated region
  $region2: #{mlp_pallas.1} parent=0 // pred_check
    _
  $region3: #{mlp_pallas.1} parent=0 // pred_check_branch
    %11 = sbr.rel (0) target = $region5
  $region4: #{mlp_pallas.1} parent=0 // pred_region
    _
  $region5: #{mlp_pallas.1} parent=0 // pred_fallthru
    _
  // Predicated region
  $region6: #{mlp_pallas.1} parent=0 // pred_check
    _
  $region7: #{mlp_pallas.1} parent=0 // pred_check_branch
    %13 = sbr.rel (0) target = $region9
  $region8: #{mlp_pallas.1} parent=0 // pred_region
    _
  $region9: #{mlp_pallas.1} parent=0 // pred_fallthru
    _
  // Predicated region
  $region10: #{mlp_pallas.1} parent=0 // pred_check
    _
  $region11: #{mlp_pallas.1} parent=0 // pred_check_branch
    %15 = sbr.rel (0) target = $region13
  $region12: #{mlp_pallas.1} parent=0 // pred_region
    _
  $region13: #{mlp_pallas.1} parent=0 // pred_fallthru
    _
  // Predicated region
  $region14: #{mlp_pallas.1} parent=0 // pred_check
    _
  $region15: #{mlp_pallas.1} parent=0 // pred_check_branch
    %17 = sbr.rel (0) target = $region17
  $region16: #{mlp_pallas.1} parent=0 // pred_region
    _
  $region17: #{mlp_pallas.1} parent=0 // pred_fallthru
    _
  // Predicated region
  $region18: #{mlp_pallas.1} parent=0 // pred_check
    _
  $region19: #{mlp_pallas.1} parent=0 // pred_check_branch
    %19 = sbr.rel (0) target = $region21
  $region20: #{mlp_pallas.1} parent=0 // pred_region
    _
  $region21: #{mlp_pallas.1} parent=0 // pred_fallthru
    _
  %p21 = scmp.eq.s32.totalorder 0, 0
  // Predicated region
  $region22: #{mlp_pallas.1} parent=0 // pred_check
    %p22 = pneg %p21
  $region23: #{mlp_pallas.1} parent=0 // pred_check_branch
    %24 = sbr.rel (%p22) target = $region25
  $region24: #{mlp_pallas.1} parent=0 // pred_region
    %v25 = vld [vmem:[%s4] sm:$0x1]
    %v27 = vlaneseq
    %v28 = vshrl.u32 %v27, 7
    %v29 = vsub.s32 0, %v28
    %v30 = vrot.slane %v25, %v29
    %32 = vst [vmem:[#allocation2] sm:$0xff] %v30
    %33 = vst [vmem:[#allocation2 + $0x8] sm:$0xff] %v30
  $region25: #{mlp_pallas.1} parent=0 // pred_fallthru
    _
  %v34 = vld [vmem:[%s0] sm:$0xf]
  %v35 = vld [vmem:[%s0 + $0x4] sm:$0xf]
  %v36 = vld [vmem:[%s1] sm:$0xf]
  %v37 = vld [vmem:[%s1 + $0x4] sm:$0xf]
  %v38 = vld [vmem:[%s1 + $0x8] sm:$0xf]
  %v39 = vld [vmem:[%s1 + $0xc] sm:$0xf]
  %v40 = vld [vmem:[%s1 + $0x10] sm:$0xf]
  %v41 = vld [vmem:[%s1 + $0x14] sm:$0xf]
  %v42 = vld [vmem:[%s1 + $0x18] sm:$0xf]
  %v43 = vld [vmem:[%s1 + $0x1c] sm:$0xf]
  %v44 = vld [vmem:[%s1 + $0x20] sm:$0xf]
  %v45 = vld [vmem:[%s1 + $0x24] sm:$0xf]
  %v46 = vld [vmem:[%s1 + $0x28] sm:$0xf]
  %v47 = vld [vmem:[%s1 + $0x2c] sm:$0xf]
  %v48 = vld [vmem:[%s1 + $0x30] sm:$0xf]
  %v49 = vld [vmem:[%s1 + $0x34] sm:$0xf]
  %v50 = vld [vmem:[%s1 + $0x38] sm:$0xf]
  %v51 = vld [vmem:[%s1 + $0x3c] sm:$0xf]
  %v52 = vld [vmem:[%s2] sm:$0x1]
  %v54 = vlaneseq
  %v55 = vshrl.u32 %v54, 7
  %v56 = vsub.s32 0, %v55
  %v57 = vrot.slane %v52, %v56
  %v61 = vunpack.c.l.b16 %v34
  %v62 = vunpack.c.l.b16 %v35
  %v63 = vpack.c.b16 %v62, %v61
  %v81 = vunpack.c.l.b16 %v36
  %v82 = vunpack.c.l.b16 %v37
  %v83 = vunpack.c.l.b16 %v38
  %v84 = vunpack.c.l.b16 %v39
  %v85 = vunpack.c.l.b16 %v40
  %v86 = vunpack.c.l.b16 %v41
  %v87 = vunpack.c.l.b16 %v42
  %v88 = vunpack.c.l.b16 %v43
  %v89 = vunpack.c.l.b16 %v44
  %v90 = vunpack.c.l.b16 %v45
  %v91 = vunpack.c.l.b16 %v46
  %v92 = vunpack.c.l.b16 %v47
  %v93 = vunpack.c.l.b16 %v48
  %v94 = vunpack.c.l.b16 %v49
  %v95 = vunpack.c.l.b16 %v50
  %v96 = vunpack.c.l.b16 %v51
  %v97 = vpack.c.b16 %v82, %v81
  %v98 = vpack.c.b16 %v84, %v83
  %v99 = vpack.c.b16 %v86, %v85
  %v100 = vpack.c.b16 %v88, %v87
  %v101 = vpack.c.b16 %v90, %v89
  %v102 = vpack.c.b16 %v92, %v91
  %v103 = vpack.c.b16 %v94, %v93
  %v104 = vpack.c.b16 %v96, %v95
  %113 = vmatprep.subr.bf16.mxu0 0
  %114 = vmatpush1.bf16.msra.mxu0 %v97
  %115 = vmatprep.subr.bf16.mxu0 0
  %116 = vmatpush1.bf16.msra.mxu0 %v98
  %117 = vmatprep.subr.bf16.mxu0 0
  %118 = vmatpush1.bf16.msra.mxu0 %v99
  %119 = vmatprep.subr.bf16.mxu0 0
  %120 = vmatpush1.bf16.msra.mxu0 %v100
  %121 = vmatprep.subr.bf16.mxu0 0
  %122 = vmatpush1.bf16.msra.mxu0 %v101
  %123 = vmatprep.subr.bf16.mxu0 0
  %124 = vmatpush1.bf16.msra.mxu0 %v102
  %125 = vmatprep.subr.bf16.mxu0 0
  %126 = vmatpush1.bf16.msra.mxu0 %v103
  %127 = vmatprep.subr.bf16.mxu0 0
  %128 = vmatpush1.bf16.msra.mxu0 %v104
  %129 = vmatprep.subr.bf16.mxu0 0
  %130 = vmatpush1.bf16.msra.mxu0 0
  %131 = vmatprep.subr.bf16.mxu0 0
  %132 = vmatpush1.bf16.msra.mxu0 0
  %133 = vmatprep.subr.bf16.mxu0 0
  %134 = vmatpush1.bf16.msra.mxu0 0
  %135 = vmatprep.subr.bf16.mxu0 0
  %136 = vmatpush1.bf16.msra.mxu0 0
  %137 = vmatprep.subr.bf16.mxu0 0
  %138 = vmatpush1.bf16.msra.mxu0 0
  %139 = vmatprep.subr.bf16.mxu0 0
  %140 = vmatpush1.bf16.msra.mxu0 0
  %141 = vmatprep.subr.bf16.mxu0 0
  %142 = vmatpush1.bf16.msra.mxu0 0
  %143 = vmatprep.subr.bf16.mxu0 0
  %144 = vmatpush1.bf16.msra.mxu0 0
  %145 = vmatprep.mubr.bf16.mxu0 0
  %146 = vmatmul.mubr.bf16.gmra.mrb[0].mxu0 %v63
  %v147 = vpop.f32.mrb[0].mxu0
  %v148 = vadd.f32 %v57, %v147
  %v149 = vpop.f32.mrb[0].mxu0
  %v150 = vpop.f32.mrb[0].mxu0
  %v151 = vadd.f32 %v57, %v150
  %v152 = vpop.f32.mrb[0].mxu0
  %153 = vdwg.mxu0
  %v154 = vmul.f32 %v148, 0.5
  %v155 = vmul.f32 %v151, 0.5
  %v156 = vmul.f32 %v148, 0.70710677
  %v157 = vmul.f32 %v151, 0.70710677
  %v158 = verf.f32.pop %v156
  %v159 = verf.f32.pop %v157
  %v160 = vadd.f32 %v158, 1.0
  %v161 = vadd.f32 %v159, 1.0
  %v162 = vmul.f32 %v154, %v160
  %v163 = vmul.f32 %v155, %v161
  %v164 = vld [vmem:[#allocation2] sm:$0xff]
  %v165 = vld [vmem:[#allocation2 + $0x8] sm:$0xff]
  %v166 = vpack.c.bf16 %v163, %v162
  %v167 = vld [vmem:[%s3] sm:$0xf]
  %v168 = vld [vmem:[%s3 + $0x4] sm:$0xf]
  %v169 = vld [vmem:[%s3 + $0x8] sm:$0xf]
  %v170 = vld [vmem:[%s3 + $0xc] sm:$0xf]
  %v171 = vld [vmem:[%s3 + $0x10] sm:$0xf]
  %v172 = vld [vmem:[%s3 + $0x14] sm:$0xf]
  %v173 = vld [vmem:[%s3 + $0x18] sm:$0xf]
  %v174 = vld [vmem:[%s3 + $0x1c] sm:$0xf]
  %v175 = vld [vmem:[%s3 + $0x20] sm:$0xf]
  %v176 = vld [vmem:[%s3 + $0x24] sm:$0xf]
  %v177 = vld [vmem:[%s3 + $0x28] sm:$0xf]
  %v178 = vld [vmem:[%s3 + $0x2c] sm:$0xf]
  %v179 = vld [vmem:[%s3 + $0x30] sm:$0xf]
  %v180 = vld [vmem:[%s3 + $0x34] sm:$0xf]
  %v181 = vld [vmem:[%s3 + $0x38] sm:$0xf]
  %v182 = vld [vmem:[%s3 + $0x3c] sm:$0xf]
  %v199 = vunpack.c.l.b16 %v167
  %v200 = vunpack.c.l.b16 %v168
  %v201 = vunpack.c.l.b16 %v169
  %v202 = vunpack.c.l.b16 %v170
  %v203 = vunpack.c.l.b16 %v171
  %v204 = vunpack.c.l.b16 %v172
  %v205 = vunpack.c.l.b16 %v173
  %v206 = vunpack.c.l.b16 %v174
  %v207 = vunpack.c.l.b16 %v175
  %v208 = vunpack.c.l.b16 %v176
  %v209 = vunpack.c.l.b16 %v177
  %v210 = vunpack.c.l.b16 %v178
  %v211 = vunpack.c.l.b16 %v179
  %v212 = vunpack.c.l.b16 %v180
  %v213 = vunpack.c.l.b16 %v181
  %v214 = vunpack.c.l.b16 %v182
  %v215 = vpack.c.b16 %v200, %v199
  %v216 = vpack.c.b16 %v202, %v201
  %v217 = vpack.c.b16 %v204, %v203
  %v218 = vpack.c.b16 %v206, %v205
  %v219 = vpack.c.b16 %v208, %v207
  %v220 = vpack.c.b16 %v210, %v209
  %v221 = vpack.c.b16 %v212, %v211
  %v222 = vpack.c.b16 %v214, %v213
  %231 = vmatprep.subr.bf16.mxu0 0
  %232 = vmatpush1.bf16.msra.mxu0 %v215
  %233 = vmatprep.subr.bf16.mxu0 0
  %234 = vmatpush1.bf16.msra.mxu0 %v216
  %235 = vmatprep.subr.bf16.mxu0 0
  %236 = vmatpush1.bf16.msra.mxu0 %v217
  %237 = vmatprep.subr.bf16.mxu0 0
  %238 = vmatpush1.bf16.msra.mxu0 %v218
  %239 = vmatprep.subr.bf16.mxu0 0
  %240 = vmatpush1.bf16.msra.mxu0 %v219
  %241 = vmatprep.subr.bf16.mxu0 0
  %242 = vmatpush1.bf16.msra.mxu0 %v220
  %243 = vmatprep.subr.bf16.mxu0 0
  %244 = vmatpush1.bf16.msra.mxu0 %v221
  %245 = vmatprep.subr.bf16.mxu0 0
  %246 = vmatpush1.bf16.msra.mxu0 %v222
  %247 = vmatprep.subr.bf16.mxu0 0
  %248 = vmatpush1.bf16.msra.mxu0 0
  %249 = vmatprep.subr.bf16.mxu0 0
  %250 = vmatpush1.bf16.msra.mxu0 0
  %251 = vmatprep.subr.bf16.mxu0 0
  %252 = vmatpush1.bf16.msra.mxu0 0
  %253 = vmatprep.subr.bf16.mxu0 0
  %254 = vmatpush1.bf16.msra.mxu0 0
  %255 = vmatprep.subr.bf16.mxu0 0
  %256 = vmatpush1.bf16.msra.mxu0 0
  %257 = vmatprep.subr.bf16.mxu0 0
  %258 = vmatpush1.bf16.msra.mxu0 0
  %259 = vmatprep.subr.bf16.mxu0 0
  %260 = vmatpush1.bf16.msra.mxu0 0
  %261 = vmatprep.subr.bf16.mxu0 0
  %262 = vmatpush1.bf16.msra.mxu0 0
  %263 = vmatprep.mubr.bf16.mxu0 0
  %264 = vmatmul.mubr.bf16.gmra.mrb[0].mxu0 %v166
  %v265 = vpop.f32.mrb[0].mxu0
  %v266 = vadd.f32 0.0, %v265
  %v267 = vpop.f32.mrb[0].mxu0
  %v268 = vpop.f32.mrb[0].mxu0
  %v269 = vadd.f32 0.0, %v268
  %v270 = vpop.f32.mrb[0].mxu0
  %271 = vdwg.mxu0
  %v272 = vadd.f32 %v164, %v266
  %v273 = vadd.f32 %v165, %v269
  %274 = vst [vmem:[#allocation2] sm:$0xff] %v272
  %275 = vst [vmem:[#allocation2 + $0x8] sm:$0xff] %v273
  // Predicated region
  $region26: #{mlp_pallas.1} parent=0 // pred_check
    %p276 = pneg %p21
  $region27: #{mlp_pallas.1} parent=0 // pred_check_branch
    %278 = sbr.rel (%p276) target = $region29
  $region28: #{mlp_pallas.1} parent=0 // pred_region
    %v279 = vld [vmem:[#allocation2] sm:$0xff]
    %v280 = vld [vmem:[#allocation2 + $0x8] sm:$0xff]
    %281 = vst [vmem:[%s5] sm:$0xff] %v279
    %282 = vst [vmem:[%s5 + $0x8] sm:$0xff] %v280
  $region29: #{mlp_pallas.1} parent=0 // pred_fallthru
    _
  // Predicated region
  $region30: #{mlp_pallas.1} parent=0 // pred_check
    _
  $region31: #{mlp_pallas.1} parent=0 // pred_check_branch
    %284 = sbr.rel (0) target = $region33
  $region32: #{mlp_pallas.1} parent=0 // pred_region
    _
  $region33: #{mlp_pallas.1} parent=0 // pred_fallthru
    _
  // Predicated region
  $region34: #{mlp_pallas.1} parent=0 // pred_check
    _
  $region35: #{mlp_pallas.1} parent=0 // pred_check_branch
    %286 = sbr.rel (0) target = $region37
  $region36: #{mlp_pallas.1} parent=0 // pred_region
    _
  $region37: #{mlp_pallas.1} parent=0 // pred_fallthru
    _

</llo_original>
